<compile_context>
chip_gen: v5e
topology: v5e:2x2
jax: 0.10.0
libtpu: 0.0.40
codegen_flags: <defaults>
</compile_context>

<pallas_src>
import jax
import jax.numpy as jnp
from jax.experimental import pallas as pl
from jax.experimental.pallas import tpu as pltpu

EPS = 1e-5
LANE = 128


def _sigmoid(x):
    # Exact sigmoid via a single EUP op (tanh); no exp / reciprocal / select.
    return 0.5 * jnp.tanh(0.5 * x) + 0.5


def _bn_sigmoid(h, g, be, n_inv):
    """Training-mode BatchNorm1d (biased variance, batch stats) + sigmoid, f32."""
    mu = jnp.sum(h, axis=0, keepdims=True) * n_inv
    d = h - mu
    var = jnp.sum(d * d, axis=0, keepdims=True) * n_inv
    scale = jax.lax.rsqrt(var + EPS) * g              # fold gamma into the scale
    return _sigmoid(d * scale + be)


def fused_decoder_kernel(x_ref, w1_ref, w2_ref, bn_ref, emb_ref, out_ref):
    n_inv = 1.0 / x_ref.shape[0]
    bn = bn_ref[...]                                  # (4, H) packed BN params
    g1, be1, g2, be2 = bn[0:1], bn[1:2], bn[2:3], bn[3:4]

    # Stage 1 (recomputed per vocab tile; hidden under the embedding DMA).
    h = jnp.dot(x_ref[...], w1_ref[...], preferred_element_type=jnp.float32)
    h = _bn_sigmoid(h, g1, be1, n_inv)
    h = jnp.dot(h.astype(jnp.bfloat16), w2_ref[...],
                preferred_element_type=jnp.float32)
    h = _bn_sigmoid(h, g2, be2, n_inv)

    # Decode: docvec @ word_embedding tile, sigmoid epilogue.
    dec = jnp.dot(h.astype(jnp.bfloat16), emb_ref[...],
                  preferred_element_type=jnp.float32)
    out_ref[...] = _sigmoid(dec).astype(out_ref.dtype)


def _vmem_cap_bytes():
    """Generation-aware VMEM cap (~48 MiB on v7x/64 MiB, ~96 MiB on v5e/v6e/128 MiB)."""
    try:
        cap = int(pltpu.get_tpu_info().vmem_capacity_bytes)
    except Exception:  # pragma: no cover - conservative fallback
        cap = 64 << 20
    return (cap * 3) // 4


def _pick_tile(V, tile_n, min_tiles):
    """Lane-dense vocab tile: as big as tile_n, but keep >= min_tiles grid steps."""
    target = min(max(tile_n, LANE), pl.cdiv(V, min_tiles) * LANE // LANE * LANE)
    # round to a multiple of 128, clamp to [128, tile_n]
    tn = max(LANE, (min(target, tile_n) // LANE) * LANE)
    # don't exceed what's needed to cover V in min_tiles steps
    tn = min(tn, max(LANE, pl.cdiv(pl.cdiv(V, min_tiles), LANE) * LANE))
    return tn


def prepare_params(params, *, tile_n=2048, min_tiles=8):
    """One-time parameter prep: bf16 casts, BN packing, vocab padding, tile pick."""
    H, V = params["emb"].shape
    tn = _pick_tile(V, tile_n, min_tiles)
    v_pad = pl.cdiv(V, tn) * tn
    emb_b = params["emb"].astype(jnp.bfloat16)
    if v_pad != V:
        emb_b = jnp.pad(emb_b, ((0, 0), (0, v_pad - V)))
    bn = jnp.concatenate(
        [params["g1"], params["be1"], params["g2"], params["be2"]],
        axis=0).astype(jnp.float32)                   # (4, H)
    return dict(
        w1=params["w1"].astype(jnp.bfloat16),         # [in, H]
        w2=params["w2"].astype(jnp.bfloat16),         # [H, H]
        bn=bn,
        emb=emb_b,                                    # [H, v_pad] bf16, pre-padded
        tn=int(tn), v=int(V),
    )


def decoder_forward(x, prep, *, out_dtype=jnp.float32):
    """x: [B, input_dim] f32.  prep: dict from prepare_params.  Returns [B, V]."""
    B, in_dim = x.shape
    H, v_pad = prep["emb"].shape
    V, tn = prep["v"], prep["tn"]
    grid = (v_pad // tn,)

    x_b = x.astype(jnp.bfloat16)                      # tiny per-call cast

    out_isz = jnp.dtype(out_dtype).itemsize
    # Resident operands + double-buffered emb/out tiles, 2x headroom.
    need = (B * in_dim * 2 + in_dim * H * 2 + H * H * 2 + 4 * H * 4
            + 2 * H * tn * 2 + 2 * B * tn * out_isz)
    vmem_bytes = int(min(max(2 * need, 8 << 20), _vmem_cap_bytes()))

    return pl.pallas_call(
        fused_decoder_kernel,
        out_shape=jax.ShapeDtypeStruct((B, V), out_dtype),
        grid_spec=pltpu.PrefetchScalarGridSpec(
            num_scalar_prefetch=0,
            grid=grid,
            in_specs=[
                pl.BlockSpec((B, in_dim), lambda j: (0, 0)),   # x (resident)
                pl.BlockSpec((in_dim, H), lambda j: (0, 0)),   # w1 (resident)
                pl.BlockSpec((H, H), lambda j: (0, 0)),        # w2 (resident)
                pl.BlockSpec((4, H), lambda j: (0, 0)),        # packed BN params
                pl.BlockSpec((H, tn), lambda j: (0, j)),       # emb tile (streamed)
            ],
            out_specs=pl.BlockSpec((B, tn), lambda j: (0, j)),  # lane-dense out tile
        ),
        compiler_params=pltpu.CompilerParams(
            dimension_semantics=("parallel",),        # megacore-shard the vocab grid
            vmem_limit_bytes=vmem_bytes),
    )(x_b, prep["w1"], prep["w2"], prep["bn"], prep["emb"])


def init_params(key, input_dim, hidden_dim, output_dim):
    """Deterministic synthetic parameters (shapes match the nn.Module __init__)."""
    ks = jax.random.split(key, 7)
    # nn.Linear stores weight as [out, in]; we keep the transposed [in, out] layout.
    w1 = jax.random.normal(ks[0], (input_dim, hidden_dim), jnp.float32) * 0.1
    b1 = jax.random.normal(ks[1], (1, hidden_dim), jnp.float32) * 0.1
    w2 = jax.random.normal(ks[2], (hidden_dim, hidden_dim), jnp.float32) * 0.1
    b2 = jax.random.normal(ks[3], (1, hidden_dim), jnp.float32) * 0.1
    # BatchNorm1d default init: gamma=1, beta=0 (randomized a bit here so the
    # BN affine path is actually exercised).
    g1 = 1.0 + 0.1 * jax.random.normal(ks[4], (1, hidden_dim), jnp.float32)
    be1 = 0.1 * jax.random.normal(ks[5], (1, hidden_dim), jnp.float32)
    g2 = jnp.ones((1, hidden_dim), jnp.float32)
    be2 = jnp.zeros((1, hidden_dim), jnp.float32)
    # word_embedding: [hidden_dim, output_dim] (random instead of torch.zeros so
    # the output is non-degenerate; shape matches the module).
    emb = jax.random.normal(ks[6], (hidden_dim, output_dim), jnp.float32) * 0.1
    return dict(w1=w1, b1=b1, g1=g1, be1=be1,
                w2=w2, b2=b2, g2=g2, be2=be2, emb=emb)


def decoder_ref(x, p):
    """Pure-JAX reference mirroring the PyTorch training-mode forward (including
    the linear biases).  Matmul operands are cast to bf16 to mirror the kernel's
    MXU dtype; everything else is f32."""
    bf16, f32 = jnp.bfloat16, jnp.float32

    def bn(h, g, be):
        mu = jnp.mean(h, axis=0, keepdims=True)
        var = jnp.mean((h - mu) ** 2, axis=0, keepdims=True)
        return (h - mu) * jax.lax.rsqrt(var + EPS) * g + be

    h = jnp.dot(x.astype(bf16), p["w1"].astype(bf16),
                preferred_element_type=f32) + p["b1"]
    h = jax.nn.sigmoid(bn(h, p["g1"], p["be1"]))
    h = jnp.dot(h.astype(bf16), p["w2"].astype(bf16),
                preferred_element_type=f32) + p["b2"]
    h = jax.nn.sigmoid(bn(h, p["g2"], p["be2"]))
    dec = jnp.dot(h.astype(bf16), p["emb"].astype(bf16),
                  preferred_element_type=f32)
    return jax.nn.sigmoid(dec)


if __name__ == "__main__":
    # Small but lane-aligned shapes (matmul dims multiples of 128).
    B, input_dim, hidden_dim, output_dim = 8, 128, 128, 1024

    key = jax.random.PRNGKey(0)
    kx, kp = jax.random.split(key)
    x = jax.random.normal(kx, (B, input_dim), jnp.float32)
    params = init_params(kp, input_dim, hidden_dim, output_dim)

    prep = prepare_params(params)          # one-time: casts, packing, padding
    out = decoder_forward(x, prep)
    jax.block_until_ready(out)

    ref = decoder_ref(x, params)
    assert out.shape == (B, output_dim)
    err = float(jnp.max(jnp.abs(out - ref)))
    # Tolerance covers FP-order differences only: the dropped (exactly
    # cancelling) linear biases and the tanh-form sigmoid are mathematically
    # identical; matmul operand dtypes (bf16) are mirrored by the reference.
    assert err < 5e-3, f"mismatch vs pure-JAX reference: {err}"
    print("KERNEL_OK")
</pallas_src>

<mosaic_0001>
module attributes {stable_mosaic.version = 11 : i64} {
  func.func @fused_decoder_kernel(%arg0: i32, %arg1: memref<8x128xbf16, #tpu.memory_space<vmem>>, %arg2: memref<128x128xbf16, #tpu.memory_space<vmem>>, %arg3: memref<128x128xbf16, #tpu.memory_space<vmem>>, %arg4: memref<4x128xf32, #tpu.memory_space<vmem>>, %arg5: memref<128x128xbf16, #tpu.memory_space<vmem>>, %arg6: memref<8x128xf32, #tpu.memory_space<vmem>>) attributes {dimension_semantics = [#tpu.dimension_semantics<parallel>], iteration_bounds = array<i64: 8>, scalar_prefetch = 0 : i64, scratch_operands = 0 : i64, tpu.core_type = #tpu.core_type<tc>, window_params = [{pipeline_mode = #tpu.pipeline_mode<synchronous>, transform_indices = @transform_0, window_bounds = array<i64: 8, 128>}, {pipeline_mode = #tpu.pipeline_mode<synchronous>, transform_indices = @transform_1, window_bounds = array<i64: 128, 128>}, {pipeline_mode = #tpu.pipeline_mode<synchronous>, transform_indices = @transform_2, window_bounds = array<i64: 128, 128>}, {pipeline_mode = #tpu.pipeline_mode<synchronous>, transform_indices = @transform_3, window_bounds = array<i64: 4, 128>}, {transform_indices = @transform_4, window_bounds = array<i64: 128, 128>}, {transform_indices = @transform_5, window_bounds = array<i64: 8, 128>}]} {
    %c0 = arith.constant 0 : index
    %c0_0 = arith.constant 0 : index
    %0 = vector.load %arg4[%c0, %c0_0] : memref<4x128xf32, #tpu.memory_space<vmem>>, vector<4x128xf32>
    %1 = vector.extract_strided_slice %0 {offsets = [0, 0], sizes = [1, 128], strides = [1, 1]} : vector<4x128xf32> to vector<1x128xf32>
    %2 = vector.extract_strided_slice %0 {offsets = [1, 0], sizes = [1, 128], strides = [1, 1]} : vector<4x128xf32> to vector<1x128xf32>
    %3 = vector.extract_strided_slice %0 {offsets = [2, 0], sizes = [1, 128], strides = [1, 1]} : vector<4x128xf32> to vector<1x128xf32>
    %4 = vector.extract_strided_slice %0 {offsets = [3, 0], sizes = [1, 128], strides = [1, 1]} : vector<4x128xf32> to vector<1x128xf32>
    %c0_1 = arith.constant 0 : index
    %c0_2 = arith.constant 0 : index
    %5 = vector.load %arg1[%c0_1, %c0_2] : memref<8x128xbf16, #tpu.memory_space<vmem>>, vector<8x128xbf16>
    %c0_3 = arith.constant 0 : index
    %c0_4 = arith.constant 0 : index
    %6 = vector.load %arg2[%c0_3, %c0_4] : memref<128x128xbf16, #tpu.memory_space<vmem>>, vector<128x128xbf16>
    %cst = arith.constant dense<0.000000e+00> : vector<8x128xf32>
    %7 = tpu.matmul %5, %6, %cst {dimension_numbers = #tpu.dot_dimension_numbers<[1], [0], [0], [1], [0, 0, 1, 1], [], []>} : vector<8x128xbf16>, vector<128x128xbf16>, vector<8x128xf32> -> vector<8x128xf32>
    %cst_5 = arith.constant dense<0.000000e+00> : vector<128xf32>
    %8 = vector.multi_reduction <add>, %7, %cst_5 [0] : vector<8x128xf32> to vector<128xf32>
    %9 = vector.shape_cast %8 : vector<128xf32> to vector<1x128xf32>
    %cst_6 = arith.constant 1.250000e-01 : f32
    %10 = vector.broadcast %cst_6 : f32 to vector<1x128xf32>
    %11 = arith.mulf %9, %10 : vector<1x128xf32>
    %12 = vector.broadcast %11 : vector<1x128xf32> to vector<8x128xf32>
    %13 = arith.subf %7, %12 : vector<8x128xf32>
    %14 = arith.mulf %13, %13 : vector<8x128xf32>
    %cst_7 = arith.constant dense<0.000000e+00> : vector<128xf32>
    %15 = vector.multi_reduction <add>, %14, %cst_7 [0] : vector<8x128xf32> to vector<128xf32>
    %16 = vector.shape_cast %15 : vector<128xf32> to vector<1x128xf32>
    %cst_8 = arith.constant 1.250000e-01 : f32
    %17 = vector.broadcast %cst_8 : f32 to vector<1x128xf32>
    %18 = arith.mulf %16, %17 : vector<1x128xf32>
    %cst_9 = arith.constant 9.99999974E-6 : f32
    %19 = vector.broadcast %cst_9 : f32 to vector<1x128xf32>
    %20 = arith.addf %18, %19 : vector<1x128xf32>
    %21 = math.rsqrt %20 : vector<1x128xf32>
    %22 = arith.mulf %21, %1 : vector<1x128xf32>
    %23 = vector.broadcast %22 : vector<1x128xf32> to vector<8x128xf32>
    %24 = arith.mulf %13, %23 : vector<8x128xf32>
    %25 = vector.broadcast %2 : vector<1x128xf32> to vector<8x128xf32>
    %26 = arith.addf %24, %25 : vector<8x128xf32>
    %cst_10 = arith.constant 5.000000e-01 : f32
    %27 = vector.broadcast %cst_10 : f32 to vector<8x128xf32>
    %28 = arith.mulf %27, %26 : vector<8x128xf32>
    %29 = math.tanh %28 : vector<8x128xf32>
    %cst_11 = arith.constant 5.000000e-01 : f32
    %30 = vector.broadcast %cst_11 : f32 to vector<8x128xf32>
    %31 = arith.mulf %30, %29 : vector<8x128xf32>
    %cst_12 = arith.constant 5.000000e-01 : f32
    %32 = vector.broadcast %cst_12 : f32 to vector<8x128xf32>
    %33 = arith.addf %31, %32 : vector<8x128xf32>
    %34 = arith.truncf %33 : vector<8x128xf32> to vector<8x128xbf16>
    %c0_13 = arith.constant 0 : index
    %c0_14 = arith.constant 0 : index
    %35 = vector.load %arg3[%c0_13, %c0_14] : memref<128x128xbf16, #tpu.memory_space<vmem>>, vector<128x128xbf16>
    %cst_15 = arith.constant dense<0.000000e+00> : vector<8x128xf32>
    %36 = tpu.matmul %34, %35, %cst_15 {dimension_numbers = #tpu.dot_dimension_numbers<[1], [0], [0], [1], [0, 0, 1, 1], [], []>} : vector<8x128xbf16>, vector<128x128xbf16>, vector<8x128xf32> -> vector<8x128xf32>
    %cst_16 = arith.constant dense<0.000000e+00> : vector<128xf32>
    %37 = vector.multi_reduction <add>, %36, %cst_16 [0] : vector<8x128xf32> to vector<128xf32>
    %38 = vector.shape_cast %37 : vector<128xf32> to vector<1x128xf32>
    %cst_17 = arith.constant 1.250000e-01 : f32
    %39 = vector.broadcast %cst_17 : f32 to vector<1x128xf32>
    %40 = arith.mulf %38, %39 : vector<1x128xf32>
    %41 = vector.broadcast %40 : vector<1x128xf32> to vector<8x128xf32>
    %42 = arith.subf %36, %41 : vector<8x128xf32>
    %43 = arith.mulf %42, %42 : vector<8x128xf32>
    %cst_18 = arith.constant dense<0.000000e+00> : vector<128xf32>
    %44 = vector.multi_reduction <add>, %43, %cst_18 [0] : vector<8x128xf32> to vector<128xf32>
    %45 = vector.shape_cast %44 : vector<128xf32> to vector<1x128xf32>
    %cst_19 = arith.constant 1.250000e-01 : f32
    %46 = vector.broadcast %cst_19 : f32 to vector<1x128xf32>
    %47 = arith.mulf %45, %46 : vector<1x128xf32>
    %cst_20 = arith.constant 9.99999974E-6 : f32
    %48 = vector.broadcast %cst_20 : f32 to vector<1x128xf32>
    %49 = arith.addf %47, %48 : vector<1x128xf32>
    %50 = math.rsqrt %49 : vector<1x128xf32>
    %51 = arith.mulf %50, %3 : vector<1x128xf32>
    %52 = vector.broadcast %51 : vector<1x128xf32> to vector<8x128xf32>
    %53 = arith.mulf %42, %52 : vector<8x128xf32>
    %54 = vector.broadcast %4 : vector<1x128xf32> to vector<8x128xf32>
    %55 = arith.addf %53, %54 : vector<8x128xf32>
    %cst_21 = arith.constant 5.000000e-01 : f32
    %56 = vector.broadcast %cst_21 : f32 to vector<8x128xf32>
    %57 = arith.mulf %56, %55 : vector<8x128xf32>
    %58 = math.tanh %57 : vector<8x128xf32>
    %cst_22 = arith.constant 5.000000e-01 : f32
    %59 = vector.broadcast %cst_22 : f32 to vector<8x128xf32>
    %60 = arith.mulf %59, %58 : vector<8x128xf32>
    %cst_23 = arith.constant 5.000000e-01 : f32
    %61 = vector.broadcast %cst_23 : f32 to vector<8x128xf32>
    %62 = arith.addf %60, %61 : vector<8x128xf32>
    %63 = arith.truncf %62 : vector<8x128xf32> to vector<8x128xbf16>
    %c0_24 = arith.constant 0 : index
    %c0_25 = arith.constant 0 : index
    %64 = vector.load %arg5[%c0_24, %c0_25] : memref<128x128xbf16, #tpu.memory_space<vmem>>, vector<128x128xbf16>
    %cst_26 = arith.constant dense<0.000000e+00> : vector<8x128xf32>
    %65 = tpu.matmul %63, %64, %cst_26 {dimension_numbers = #tpu.dot_dimension_numbers<[1], [0], [0], [1], [0, 0, 1, 1], [], []>} : vector<8x128xbf16>, vector<128x128xbf16>, vector<8x128xf32> -> vector<8x128xf32>
    %cst_27 = arith.constant 5.000000e-01 : f32
    %66 = vector.broadcast %cst_27 : f32 to vector<8x128xf32>
    %67 = arith.mulf %66, %65 : vector<8x128xf32>
    %68 = math.tanh %67 : vector<8x128xf32>
    %cst_28 = arith.constant 5.000000e-01 : f32
    %69 = vector.broadcast %cst_28 : f32 to vector<8x128xf32>
    %70 = arith.mulf %69, %68 : vector<8x128xf32>
    %cst_29 = arith.constant 5.000000e-01 : f32
    %71 = vector.broadcast %cst_29 : f32 to vector<8x128xf32>
    %72 = arith.addf %70, %71 : vector<8x128xf32>
    %c0_30 = arith.constant 0 : index
    %c0_31 = arith.constant 0 : index
    %73 = vector.load %arg6[%c0_30, %c0_31] : memref<8x128xf32, #tpu.memory_space<vmem>>, vector<8x128xf32>
    tpu.vector_store %arg6[%c0_30, %c0_31], %72 {strides = array<i32>} : memref<8x128xf32, #tpu.memory_space<vmem>>, vector<8x128xf32>,
    return
  }
  func.func @transform_0(%arg0: i32) -> (i32, i32) {
    %c0_i32 = arith.constant 0 : i32
    %c0_i32_0 = arith.constant 0 : i32
    %c0_i32_1 = arith.constant 0 : i32
    return %c0_i32, %c0_i32_0 : i32, i32
  }
  func.func @transform_1(%arg0: i32) -> (i32, i32) {
    %c0_i32 = arith.constant 0 : i32
    %c0_i32_0 = arith.constant 0 : i32
    %c0_i32_1 = arith.constant 0 : i32
    return %c0_i32, %c0_i32_0 : i32, i32
  }
  func.func @transform_2(%arg0: i32) -> (i32, i32) {
    %c0_i32 = arith.constant 0 : i32
    %c0_i32_0 = arith.constant 0 : i32
    %c0_i32_1 = arith.constant 0 : i32
    return %c0_i32, %c0_i32_0 : i32, i32
  }
  func.func @transform_3(%arg0: i32) -> (i32, i32) {
    %c0_i32 = arith.constant 0 : i32
    %c0_i32_0 = arith.constant 0 : i32
    %c0_i32_1 = arith.constant 0 : i32
    return %c0_i32, %c0_i32_0 : i32, i32
  }
  func.func @transform_4(%arg0: i32) -> (i32, i32) {
    %c0_i32 = arith.constant 0 : i32
    %c0_i32_0 = arith.constant 0 : i32
    return %c0_i32, %arg0 : i32, i32
  }
  func.func @transform_5(%arg0: i32) -> (i32, i32) {
    %c0_i32 = arith.constant 0 : i32
    %c0_i32_0 = arith.constant 0 : i32
    return %c0_i32, %arg0 : i32, i32
  }
}

</mosaic_0001>

<llo_original>
// kernel: tpu_custom_call.1
$region0: #{tpu_custom_call.1}
  #allocation0 [shape = 'u32[]', space=smem, size = 0x4, offset = 0x4, fixed_abs, tag = 'smem constant byte address 0x4 - core index']
  #allocation1 [shape = 'u32[72,128]{1,0:T(1,128)}', space=vmem, size = 0x9000, scoped, tag = 'internal scratch']
  %s0 = inlined_call_operand.hbm [shape: bf16[8,128], index: 0, kind: input, shape index: {}]
  %s1 = inlined_call_operand.hbm [shape: bf16[128,128], index: 1, kind: input, shape index: {}]
  %s2 = inlined_call_operand.hbm [shape: bf16[128,128], index: 2, kind: input, shape index: {}]
  %s3 = inlined_call_operand.hbm [shape: f32[4,128], index: 3, kind: input, shape index: {}]
  %s4 = inlined_call_operand.hbm [shape: bf16[128,1024], index: 4, kind: input, shape index: {}]
  %s5 = inlined_call_operand.hbm [shape: f32[8,1024], index: 5, kind: output, shape index: {}]
  %s6 = sld [smem:[#allocation0]]
  $region73: #{tpu_custom_call.1} parent=0
    _
  %s8 = ssub.s32 1, %s6
  %s9 = scalar_select 0, %s8, %s6
  $region1: #{tpu_custom_call.1} parent=0
    #allocation2 [shape = 'u8[2048]{0}', space=vmem, size = 0x800, scoped, tag = 'input window, operand 0, single buffered']
    #allocation3 [shape = 's32[2]{0}', space=sflag, size = 0x8, scoped, tag = 'scoped memory for tpu_custom_call.1']
    #allocation4 [shape = 's32[2]{0}', space=sflag, size = 0x8, scoped, tag = 'scoped memory for tpu_custom_call.1']
    #allocation5 [shape = 'u8[32768]{0}', space=vmem, size = 0x8000, scoped, tag = 'input window, operand 1, single buffered']
    #allocation6 [shape = 's32[1]{0}', space=sflag, size = 0x4, scoped, tag = 'scoped memory for tpu_custom_call.1']
    #allocation7 [shape = 'u8[32768]{0}', space=vmem, size = 0x8000, scoped, tag = 'input window, operand 2, single buffered']
    #allocation8 [shape = 'u8[2048]{0}', space=vmem, size = 0x800, scoped, tag = 'input window, operand 3, single buffered']
    #allocation9 [shape = 's32[1]{0}', space=sflag, size = 0x4, scoped, tag = 'scoped memory for tpu_custom_call.1']
    #allocation10 [shape = 'u8[65536]{0}', space=vmem, size = 0x10000, scoped, tag = 'input window, operand 4']
    #allocation11 [shape = 'u8[8192]{0}', space=vmem, size = 0x2000, scoped, tag = 'output window, operand 0']
    %10 = vsyncpa [#allocation3], 0
    %11 = vsyncpa [#allocation6], 0
    %12 = vsyncpa [#allocation9], 0
    %13 = vsyncpa [#allocation4], 0
    %s14 = scalar_lea.sflag [#allocation4], 1
    %15 = vsyncpa %s14, 0
    loop: start=0, step=1, limit=10
    $region2: #{tpu_custom_call.1} parent=1 // loop_pre_header
      _
    $region3: #{tpu_custom_call.1} parent=1 // loop_header
      %s17 = sphi 0, %s21
      %p18 = scmp.ge.s32.totalorder %s17, 10
      %s25 = sphi 0, %s25
      %s27 = sphi 0, %s25
      %s28 = sphi 0, %s27
      %s42 = sphi 0, %s28
      %s46 = sphi 0, %s46
      %s48 = sphi 0, %s46
      %s49 = sphi 0, %s48
      %s63 = sphi 0, %s49
      %s67 = sphi 0, %s67
      %s69 = sphi 0, %s67
      %s70 = sphi 0, %s69
      %s84 = sphi 0, %s70
      %s88 = sphi 0, %s88
      %s90 = sphi 0, %s88
      %s91 = sphi 0, %s90
      %s105 = sphi 0, %s91
      %s111 = sphi 0, %s113
      %s114 = sphi 0, %s111
      %s115 = sphi 0, %s114
      %s131 = sphi 0, %s115
      %s137 = sphi 0, %s139
      %s140 = sphi 0, %s137
      %s141 = sphi 0, %s140
      %s157 = sphi 0, %s141
    $region4: #{tpu_custom_call.1} parent=1 // loop_header_branch
      %20 = sbr.rel (%p18) target = $region8
    $region5: #{tpu_custom_call.1} parent=1 // loop_body
      %s22 = ssub.s32 %s17, 1
      %s23 = ssub.s32 %s17, 2
      %s24 = sadd.s32 %s17, 1
      %s26 = sadd.s32 %s25, 1
      %p29 = scmp.eq.s32.totalorder %s17, 7
      %p30 = scmp.ne.s32.totalorder %s25, %s27
      %p31 = scmp.eq.s32.totalorder %s17, 0
      %p32 = por %p30, %p31
      %p33 = scmp.ne.s32.totalorder %s25, %s27
      %p34 = scmp.eq.s32.totalorder %s22, 7
      %p35 = por %p33, %p34
      %p36 = scmp.ne.s32.totalorder %s27, %s28
      %p37 = scmp.eq.s32.totalorder %s22, 0
      %p38 = por %p36, %p37
      %p39 = scmp.ne.s32.totalorder %s27, %s28
      %p40 = scmp.eq.s32.totalorder %s23, 7
      %p41 = por %p39, %p40
      %p43 = scmp.ne.s32.totalorder %s28, %s42
      %p44 = scmp.eq.s32.totalorder %s23, 0
      %p45 = por %p43, %p44
      %s47 = sadd.s32 %s46, 1
      %p50 = scmp.eq.s32.totalorder %s17, 7
      %p51 = scmp.ne.s32.totalorder %s46, %s48
      %p52 = scmp.eq.s32.totalorder %s17, 0
      %p53 = por %p51, %p52
      %p54 = scmp.ne.s32.totalorder %s46, %s48
      %p55 = scmp.eq.s32.totalorder %s22, 7
      %p56 = por %p54, %p55
      %p57 = scmp.ne.s32.totalorder %s48, %s49
      %p58 = scmp.eq.s32.totalorder %s22, 0
      %p59 = por %p57, %p58
      %p60 = scmp.ne.s32.totalorder %s48, %s49
      %p61 = scmp.eq.s32.totalorder %s23, 7
      %p62 = por %p60, %p61
      %p64 = scmp.ne.s32.totalorder %s49, %s63
      %p65 = scmp.eq.s32.totalorder %s23, 0
      %p66 = por %p64, %p65
      %s68 = sadd.s32 %s67, 1
      %p71 = scmp.eq.s32.totalorder %s17, 7
      %p72 = scmp.ne.s32.totalorder %s67, %s69
      %p73 = scmp.eq.s32.totalorder %s17, 0
      %p74 = por %p72, %p73
      %p75 = scmp.ne.s32.totalorder %s67, %s69
      %p76 = scmp.eq.s32.totalorder %s22, 7
      %p77 = por %p75, %p76
      %p78 = scmp.ne.s32.totalorder %s69, %s70
      %p79 = scmp.eq.s32.totalorder %s22, 0
      %p80 = por %p78, %p79
      %p81 = scmp.ne.s32.totalorder %s69, %s70
      %p82 = scmp.eq.s32.totalorder %s23, 7
      %p83 = por %p81, %p82
      %p85 = scmp.ne.s32.totalorder %s70, %s84
      %p86 = scmp.eq.s32.totalorder %s23, 0
      %p87 = por %p85, %p86
      %s89 = sadd.s32 %s88, 1
      %p92 = scmp.eq.s32.totalorder %s17, 7
      %p93 = scmp.ne.s32.totalorder %s88, %s90
      %p94 = scmp.eq.s32.totalorder %s17, 0
      %p95 = por %p93, %p94
      %p96 = scmp.ne.s32.totalorder %s88, %s90
      %p97 = scmp.eq.s32.totalorder %s22, 7
      %p98 = por %p96, %p97
      %p99 = scmp.ne.s32.totalorder %s90, %s91
      %p100 = scmp.eq.s32.totalorder %s22, 0
      %p101 = por %p99, %p100
      %p102 = scmp.ne.s32.totalorder %s90, %s91
      %p103 = scmp.eq.s32.totalorder %s23, 7
      %p104 = por %p102, %p103
      %p106 = scmp.ne.s32.totalorder %s91, %s105
      %p107 = scmp.eq.s32.totalorder %s23, 0
      %p108 = por %p106, %p107
      %s109 = ssub.s32 %s17, %s24
      %p110 = scmp.eq.s32.totalorder %s109, 0
      %s112 = sadd.s32 %s111, 1
      %s113 = scalar_select %p110, %s111, %s112
      %p116 = pneg %p110
      %p117 = scmp.eq.s32.totalorder %s17, 7
      %p118 = por %p116, %p117
      %p119 = scmp.ne.s32.totalorder %s111, %s114
      %p120 = scmp.eq.s32.totalorder %s17, 0
      %p121 = por %p119, %p120
      %p122 = scmp.ne.s32.totalorder %s111, %s114
      %p123 = scmp.eq.s32.totalorder %s22, 7
      %p124 = por %p122, %p123
      %p125 = scmp.ne.s32.totalorder %s114, %s115
      %p126 = scmp.eq.s32.totalorder %s22, 0
      %p127 = por %p125, %p126
      %p128 = scmp.ne.s32.totalorder %s114, %s115
      %p129 = scmp.eq.s32.totalorder %s23, 7
      %p130 = por %p128, %p129
      %p132 = scmp.ne.s32.totalorder %s115, %s131
      %p133 = scmp.eq.s32.totalorder %s23, 0
      %p134 = por %p132, %p133
      %s135 = ssub.s32 %s17, %s24
      %p136 = scmp.eq.s32.totalorder %s135, 0
      %s138 = sadd.s32 %s137, 1
      %s139 = scalar_select %p136, %s137, %s138
      %p142 = pneg %p136
      %p143 = scmp.eq.s32.totalorder %s17, 7
      %p144 = por %p142, %p143
      %p145 = scmp.ne.s32.totalorder %s137, %s140
      %p146 = scmp.eq.s32.totalorder %s17, 0
      %p147 = por %p145, %p146
      %p148 = scmp.ne.s32.totalorder %s137, %s140
      %p149 = scmp.eq.s32.totalorder %s22, 7
      %p150 = por %p148, %p149
      %p151 = scmp.ne.s32.totalorder %s140, %s141
      %p152 = scmp.eq.s32.totalorder %s22, 0
      %p153 = por %p151, %p152
      %p154 = scmp.ne.s32.totalorder %s140, %s141
      %p155 = scmp.eq.s32.totalorder %s23, 7
      %p156 = por %p154, %p155
      %p158 = scmp.ne.s32.totalorder %s141, %s157
      %p159 = scmp.eq.s32.totalorder %s23, 0
      %p160 = por %p158, %p159
      %p161 = scmp.le.s32.totalorder 1, %s17
      %p162 = scmp.lt.s32.totalorder %s17, 9
      %p163 = pnand %p161, %p162
      %p164 = pneg %p163
      // Predicated region
      $region9: #{tpu_custom_call.1} parent=5 // pred_check
        _
      $region10: #{tpu_custom_call.1} parent=5 // pred_check_branch
        %166 = sbr.rel (%p163) target = $region12
      $region11: #{tpu_custom_call.1} parent=5 // pred_region
        %s167 = ssub.s32 %s17, 1
        // Predicated region
        $region13: #{tpu_custom_call.1} parent=11 // pred_check
          %p168 = pneg %p38
        $region14: #{tpu_custom_call.1} parent=11 // pred_check_branch
          %170 = sbr.rel (%p168) target = $region16
        $region15: #{tpu_custom_call.1} parent=11 // pred_region
          %172 = vsyncadd [#allocation3], 0
          %s174 = sshll.u32 %s0, 4
          %s175 = int_to_ptr.hbm [resolvable:$true] %s174
          %s176 = sshll.u32 [#allocation2], 4
          %s177 = int_to_ptr.vmem [resolvable:$true] %s176
          %179 = dma.hbm_to_vmem [thread:$0]  %s175, 64, %s177, [#allocation3]
        $region16: #{tpu_custom_call.1} parent=11 // pred_fallthru
          _
        // Predicated region
        $region17: #{tpu_custom_call.1} parent=11 // pred_check
          %p180 = pneg %p59
        $region18: #{tpu_custom_call.1} parent=11 // pred_check_branch
          %182 = sbr.rel (%p180) target = $region20
        $region19: #{tpu_custom_call.1} parent=11 // pred_region
          %184 = vsyncadd [#allocation6], 0
          %s185 = sshll.u32 %s1, 4
          %s186 = int_to_ptr.hbm [resolvable:$true] %s185
          %s187 = sshll.u32 [#allocation5], 4
          %s188 = int_to_ptr.vmem [resolvable:$true] %s187
          %193 = dma.hbm_to_vmem [thread:$0]  %s186, 1024, %s188, [#allocation6], 64, 64, 4
        $region20: #{tpu_custom_call.1} parent=11 // pred_fallthru
          _
        // Predicated region
        $region21: #{tpu_custom_call.1} parent=11 // pred_check
          %p194 = pneg %p80
        $region22: #{tpu_custom_call.1} parent=11 // pred_check_branch
          %196 = sbr.rel (%p194) target = $region24
        $region23: #{tpu_custom_call.1} parent=11 // pred_region
          %198 = vsyncadd [#allocation6], 0
          %s199 = sshll.u32 %s2, 4
          %s200 = int_to_ptr.hbm [resolvable:$true] %s199
          %s201 = sshll.u32 [#allocation7], 4
          %s202 = int_to_ptr.vmem [resolvable:$true] %s201
          %207 = dma.hbm_to_vmem [thread:$0]  %s200, 1024, %s202, [#allocation6], 64, 64, 4
        $region24: #{tpu_custom_call.1} parent=11 // pred_fallthru
          _
        // Predicated region
        $region25: #{tpu_custom_call.1} parent=11 // pred_check
          %p208 = pneg %p101
        $region26: #{tpu_custom_call.1} parent=11 // pred_check_branch
          %210 = sbr.rel (%p208) target = $region28
        $region27: #{tpu_custom_call.1} parent=11 // pred_region
          %212 = vsyncadd [#allocation9], 0
          %s214 = sshll.u32 %s3, 4
          %s215 = int_to_ptr.hbm [resolvable:$true] %s214
          %s216 = sshll.u32 [#allocation8], 4
          %s217 = int_to_ptr.vmem [resolvable:$true] %s216
          %219 = dma.hbm_to_vmem [thread:$0]  %s215, 64, %s217, [#allocation9]
        $region28: #{tpu_custom_call.1} parent=11 // pred_fallthru
          _
      $region12: #{tpu_custom_call.1} parent=5 // pred_fallthru
        _
      %p220 = scmp.lt.s32.totalorder %s17, 8
      // Predicated region
      $region29: #{tpu_custom_call.1} parent=5 // pred_check
        %p221 = pneg %p220
      $region30: #{tpu_custom_call.1} parent=5 // pred_check_branch
        %223 = sbr.rel (%p221) target = $region32
      $region31: #{tpu_custom_call.1} parent=5 // pred_region
        // Predicated region
        $region33: #{tpu_custom_call.1} parent=31 // pred_check
          %p224 = pneg %p121
        $region34: #{tpu_custom_call.1} parent=31 // pred_check_branch
          %226 = sbr.rel (%p224) target = $region36
        $region35: #{tpu_custom_call.1} parent=31 // pred_region
          %s227 = sand.u32 %s17, 1
          %s228 = scalar_lea.sflag [#allocation3], %s227
          %s229 = sand.u32 %s111, 1
          %s230 = smul.addr %s229, 64
          %s231 = scalar_lea.vmem [#allocation10], %s230
          %233 = vsyncadd %s228, 0
          %s234 = smul.addr %s17, 4
          %s235 = scalar_lea.hbm %s4, %s234
          %s236 = sshll.u32 %s235, 4
          %s237 = int_to_ptr.hbm [resolvable:$true] %s236
          %s238 = sshll.u32 %s231, 4
          %s239 = int_to_ptr.vmem [resolvable:$true] %s238
          %244 = dma.hbm_to_vmem [thread:$0]  %s237, 1024, %s239, %s228, 512, 64, 4
        $region36: #{tpu_custom_call.1} parent=31 // pred_fallthru
          _
      $region32: #{tpu_custom_call.1} parent=5 // pred_fallthru
        _
      %p245 = scmp.le.s32.totalorder 1, %s17
      %p246 = scmp.lt.s32.totalorder %s17, 9
      %p247 = pnand %p245, %p246
      %p248 = pneg %p247
      // Predicated region
      $region37: #{tpu_custom_call.1} parent=5 // pred_check
        _
      $region38: #{tpu_custom_call.1} parent=5 // pred_check_branch
        %250 = sbr.rel (%p247) target = $region40
      $region39: #{tpu_custom_call.1} parent=5 // pred_region
        %s251 = ssub.s32 %s17, 1
        // Predicated region
        $region41: #{tpu_custom_call.1} parent=39 // pred_check
          %p252 = pneg %p38
        $region42: #{tpu_custom_call.1} parent=39 // pred_check_branch
          %254 = sbr.rel (%p252) target = $region44
        $region43: #{tpu_custom_call.1} parent=39 // pred_region
          %256 = dma.done [#allocation3], 64
        $region44: #{tpu_custom_call.1} parent=39 // pred_fallthru
          _
        // Predicated region
        $region45: #{tpu_custom_call.1} parent=39 // pred_check
          %p257 = pneg %p59
        $region46: #{tpu_custom_call.1} parent=39 // pred_check_branch
          %259 = sbr.rel (%p257) target = $region48
        $region47: #{tpu_custom_call.1} parent=39 // pred_region
          %261 = dma.done [#allocation6], 1024
        $region48: #{tpu_custom_call.1} parent=39 // pred_fallthru
          _
        // Predicated region
        $region49: #{tpu_custom_call.1} parent=39 // pred_check
          %p262 = pneg %p80
        $region50: #{tpu_custom_call.1} parent=39 // pred_check_branch
          %264 = sbr.rel (%p262) target = $region52
        $region51: #{tpu_custom_call.1} parent=39 // pred_region
          %266 = dma.done [#allocation6], 1024
        $region52: #{tpu_custom_call.1} parent=39 // pred_fallthru
          _
        // Predicated region
        $region53: #{tpu_custom_call.1} parent=39 // pred_check
          %p267 = pneg %p101
        $region54: #{tpu_custom_call.1} parent=39 // pred_check_branch
          %269 = sbr.rel (%p267) target = $region56
        $region55: #{tpu_custom_call.1} parent=39 // pred_region
          %271 = dma.done [#allocation9], 64
        $region56: #{tpu_custom_call.1} parent=39 // pred_fallthru
          _
        %s272 = sand.u32 %s22, 1
        %s273 = scalar_lea.sflag [#allocation3], %s272
        %s274 = sand.u32 %s114, 1
        %s275 = smul.addr %s274, 64
        %s276 = scalar_lea.vmem [#allocation10], %s275
        // Predicated region
        $region57: #{tpu_custom_call.1} parent=39 // pred_check
          %p277 = pneg %p127
        $region58: #{tpu_custom_call.1} parent=39 // pred_check_branch
          %279 = sbr.rel (%p277) target = $region60
        $region59: #{tpu_custom_call.1} parent=39 // pred_region
          %281 = dma.done %s273, 1024
        $region60: #{tpu_custom_call.1} parent=39 // pred_fallthru
          _
        %p282 = pneg %p38
        %p283 = pneg %p35
        %p284 = pneg %p59
        %p285 = pneg %p56
        %p286 = pneg %p80
        %p287 = pneg %p77
        %p288 = pneg %p101
        %p289 = pneg %p98
        %s290 = sand.u32 %s22, 1
        %s291 = scalar_lea.sflag [#allocation3], %s290
        %s292 = sand.u32 %s114, 1
        %s293 = smul.addr %s292, 64
        %s294 = scalar_lea.vmem [#allocation10], %s293
        %p295 = pneg %p127
        %p296 = pneg %p124
        %p297 = pneg %p153
        %p298 = pneg %p150
        %s299 = sand.u32 %s140, 1
        %s300 = scalar_lea.sflag [#allocation4], %s299
        %s301 = sand.u32 %s140, 1
        %s302 = smul.addr %s301, 8
        %s303 = scalar_lea.vmem [#allocation11], %s302
        %v304 = vld [vmem:[#allocation8] sm:$0xf]
        %v305 = vld [vmem:[#allocation2] sm:$0xf]
        %v306 = vld [vmem:[#allocation5] sm:$0xf]
        %v307 = vld [vmem:[#allocation5 + $0x4] sm:$0xf]
        %v308 = vld [vmem:[#allocation5 + $0x8] sm:$0xf]
        %v309 = vld [vmem:[#allocation5 + $0xc] sm:$0xf]
        %v310 = vld [vmem:[#allocation5 + $0x10] sm:$0xf]
        %v311 = vld [vmem:[#allocation5 + $0x14] sm:$0xf]
        %v312 = vld [vmem:[#allocation5 + $0x18] sm:$0xf]
        %v313 = vld [vmem:[#allocation5 + $0x1c] sm:$0xf]
        %v314 = vld [vmem:[#allocation5 + $0x20] sm:$0xf]
        %v315 = vld [vmem:[#allocation5 + $0x24] sm:$0xf]
        %v316 = vld [vmem:[#allocation5 + $0x28] sm:$0xf]
        %v317 = vld [vmem:[#allocation5 + $0x2c] sm:$0xf]
        %v318 = vld [vmem:[#allocation5 + $0x30] sm:$0xf]
        %v319 = vld [vmem:[#allocation5 + $0x34] sm:$0xf]
        %v320 = vld [vmem:[#allocation5 + $0x38] sm:$0xf]
        %v321 = vld [vmem:[#allocation5 + $0x3c] sm:$0xf]
        %v338 = vunpack.c.l.b16 %v306
        %v339 = vunpack.c.l.b16 %v307
        %v340 = vunpack.c.l.b16 %v308
        %v341 = vunpack.c.l.b16 %v309
        %v342 = vunpack.c.l.b16 %v310
        %v343 = vunpack.c.l.b16 %v311
        %v344 = vunpack.c.l.b16 %v312
        %v345 = vunpack.c.l.b16 %v313
        %v346 = vunpack.c.l.b16 %v314
        %v347 = vunpack.c.l.b16 %v315
        %v348 = vunpack.c.l.b16 %v316
        %v349 = vunpack.c.l.b16 %v317
        %v350 = vunpack.c.l.b16 %v318
        %v351 = vunpack.c.l.b16 %v319
        %v352 = vunpack.c.l.b16 %v320
        %v353 = vunpack.c.l.b16 %v321
        %v354 = vpack.c.b16 %v339, %v338
        %v355 = vpack.c.b16 %v341, %v340
        %v356 = vpack.c.b16 %v343, %v342
        %v357 = vpack.c.b16 %v345, %v344
        %v358 = vpack.c.b16 %v347, %v346
        %v359 = vpack.c.b16 %v349, %v348
        %v360 = vpack.c.b16 %v351, %v350
        %v361 = vpack.c.b16 %v353, %v352
        %370 = vmatpush.bf16.msra.mxu0 %v361
        %371 = vmatpush.bf16.msra.mxu0 %v360
        %372 = vmatpush.bf16.msra.mxu0 %v359
        %373 = vmatpush.bf16.msra.mxu0 %v358
        %374 = vmatpush.bf16.msra.mxu0 %v357
        %375 = vmatpush.bf16.msra.mxu0 %v356
        %376 = vmatpush.bf16.msra.mxu0 %v355
        %377 = vmatpush.bf16.msra.mxu0 %v354
        %378 = vmatmul.bf16.gmra.mxu0 %v305
        %v379 = vpop.f32.mrf.mxu0
        %v380 = vadd.f32 0.0, %v379
        %v381 = vpop.f32.mrf.mxu0
        %382 = vdwg.mxu0
        %v383 = vrot.slane %v380, 4
        %v384 = vadd.f32 %v380, %v383
        %v385 = vrot.slane %v384, 2
        %v386 = vadd.f32 %v384, %v385
        %v387 = vrot.slane %v386, 1
        %v388 = vadd.f32 %v386, %v387
        %v389 = vmul.f32 %v388, 0.125
        %v390 = vsub.f32 %v380, %v389
        %v391 = vmul.f32 %v390, %v390
        %v392 = vrot.slane %v391, 4
        %v393 = vadd.f32 %v391, %v392
        %v394 = vrot.slane %v393, 2
        %v395 = vadd.f32 %v393, %v394
        %v396 = vrot.slane %v395, 1
        %v397 = vadd.f32 %v395, %v396
        %v398 = vmul.f32 %v397, 0.125
        %v399 = vadd.f32 %v398, 1e-05
        %v400 = vrsqrt.pop %v399
        %v401 = vmul.f32 %v400, %v399
        %v402 = vmul.f32 %v401, %v400
        %v403 = vmul.f32 0.5, %v402
        %v404 = vsub.f32 1.5, %v403
        %v405 = vmul.f32 %v400, %v404
        %vm406 = vweird.f32 %v399
        %vm407 = vweird.f32 %v400
        %vm408 = vmor %vm406, %vm407
        %v409 = vsel %vm408, %v400, %v405
        %v410 = vmul.f32 %v409, %v304
        %v411 = vperm.slane %v410, 0
        %v412 = vmul.f32 %v390, %v411
        %v413 = vperm.slane %v304, 1
        %v414 = vadd.f32 %v412, %v413
        %v415 = vmul.f32 %v414, 0.5
        %v416 = vtanh.pop %v415
        %v417 = vmul.f32 %v416, 0.5
        %v418 = vadd.f32 %v417, 0.5
        %v419 = vpack.c.bf16 %v418, %v418
        %v420 = vld [vmem:[#allocation7] sm:$0xf]
        %v421 = vld [vmem:[#allocation7 + $0x4] sm:$0xf]
        %v422 = vld [vmem:[#allocation7 + $0x8] sm:$0xf]
        %v423 = vld [vmem:[#allocation7 + $0xc] sm:$0xf]
        %v424 = vld [vmem:[#allocation7 + $0x10] sm:$0xf]
        %v425 = vld [vmem:[#allocation7 + $0x14] sm:$0xf]
        %v426 = vld [vmem:[#allocation7 + $0x18] sm:$0xf]
        %v427 = vld [vmem:[#allocation7 + $0x1c] sm:$0xf]
        %v428 = vld [vmem:[#allocation7 + $0x20] sm:$0xf]
        %v429 = vld [vmem:[#allocation7 + $0x24] sm:$0xf]
        %v430 = vld [vmem:[#allocation7 + $0x28] sm:$0xf]
        %v431 = vld [vmem:[#allocation7 + $0x2c] sm:$0xf]
        %v432 = vld [vmem:[#allocation7 + $0x30] sm:$0xf]
        %v433 = vld [vmem:[#allocation7 + $0x34] sm:$0xf]
        %v434 = vld [vmem:[#allocation7 + $0x38] sm:$0xf]
        %v435 = vld [vmem:[#allocation7 + $0x3c] sm:$0xf]
        %v452 = vunpack.c.l.b16 %v420
        %v453 = vunpack.c.l.b16 %v421
        %v454 = vunpack.c.l.b16 %v422
        %v455 = vunpack.c.l.b16 %v423
        %v456 = vunpack.c.l.b16 %v424
        %v457 = vunpack.c.l.b16 %v425
        %v458 = vunpack.c.l.b16 %v426
        %v459 = vunpack.c.l.b16 %v427
        %v460 = vunpack.c.l.b16 %v428
        %v461 = vunpack.c.l.b16 %v429
        %v462 = vunpack.c.l.b16 %v430
        %v463 = vunpack.c.l.b16 %v431
        %v464 = vunpack.c.l.b16 %v432
        %v465 = vunpack.c.l.b16 %v433
        %v466 = vunpack.c.l.b16 %v434
        %v467 = vunpack.c.l.b16 %v435
        %v468 = vpack.c.b16 %v453, %v452
        %v469 = vpack.c.b16 %v455, %v454
        %v470 = vpack.c.b16 %v457, %v456
        %v471 = vpack.c.b16 %v459, %v458
        %v472 = vpack.c.b16 %v461, %v460
        %v473 = vpack.c.b16 %v463, %v462
        %v474 = vpack.c.b16 %v465, %v464
        %v475 = vpack.c.b16 %v467, %v466
        %484 = vmatpush.bf16.msra.mxu0 %v475
        %485 = vmatpush.bf16.msra.mxu0 %v474
        %486 = vmatpush.bf16.msra.mxu0 %v473
        %487 = vmatpush.bf16.msra.mxu0 %v472
        %488 = vmatpush.bf16.msra.mxu0 %v471
        %489 = vmatpush.bf16.msra.mxu0 %v470
        %490 = vmatpush.bf16.msra.mxu0 %v469
        %491 = vmatpush.bf16.msra.mxu0 %v468
        %492 = vmatmul.bf16.gmra.mxu0 %v419
        %v493 = vpop.f32.mrf.mxu0
        %v494 = vadd.f32 0.0, %v493
        %v495 = vpop.f32.mrf.mxu0
        %496 = vdwg.mxu0
        %v497 = vrot.slane %v494, 4
        %v498 = vadd.f32 %v494, %v497
        %v499 = vrot.slane %v498, 2
        %v500 = vadd.f32 %v498, %v499
        %v501 = vrot.slane %v500, 1
        %v502 = vadd.f32 %v500, %v501
        %v503 = vmul.f32 %v502, 0.125
        %v504 = vsub.f32 %v494, %v503
        %v505 = vmul.f32 %v504, %v504
        %v506 = vrot.slane %v505, 4
        %v507 = vadd.f32 %v505, %v506
        %v508 = vrot.slane %v507, 2
        %v509 = vadd.f32 %v507, %v508
        %v510 = vrot.slane %v509, 1
        %v511 = vadd.f32 %v509, %v510
        %v512 = vmul.f32 %v511, 0.125
        %v513 = vadd.f32 %v512, 1e-05
        %v514 = vrsqrt.pop %v513
        %v515 = vmul.f32 %v514, %v513
        %v516 = vmul.f32 %v515, %v514
        %v517 = vmul.f32 0.5, %v516
        %v518 = vsub.f32 1.5, %v517
        %v519 = vmul.f32 %v514, %v518
        %vm520 = vweird.f32 %v513
        %vm521 = vweird.f32 %v514
        %vm522 = vmor %vm520, %vm521
        %v523 = vsel %vm522, %v514, %v519
        %v524 = vmul.f32 %v523, %v304
        %v525 = vperm.slane %v524, 2
        %v526 = vmul.f32 %v504, %v525
        %v527 = vperm.slane %v304, 3
        %v528 = vadd.f32 %v526, %v527
        %v529 = vmul.f32 %v528, 0.5
        %v530 = vtanh.pop %v529
        %v531 = vmul.f32 %v530, 0.5
        %v532 = vadd.f32 %v531, 0.5
        %v533 = vpack.c.bf16 %v532, %v532
        %v534 = vld [vmem:[%s276] sm:$0xf]
        %v535 = vld [vmem:[%s276 + $0x4] sm:$0xf]
        %v536 = vld [vmem:[%s276 + $0x8] sm:$0xf]
        %v537 = vld [vmem:[%s276 + $0xc] sm:$0xf]
        %v538 = vld [vmem:[%s276 + $0x10] sm:$0xf]
        %v539 = vld [vmem:[%s276 + $0x14] sm:$0xf]
        %v540 = vld [vmem:[%s276 + $0x18] sm:$0xf]
        %v541 = vld [vmem:[%s276 + $0x1c] sm:$0xf]
        %v542 = vld [vmem:[%s276 + $0x20] sm:$0xf]
        %v543 = vld [vmem:[%s276 + $0x24] sm:$0xf]
        %v544 = vld [vmem:[%s276 + $0x28] sm:$0xf]
        %v545 = vld [vmem:[%s276 + $0x2c] sm:$0xf]
        %v546 = vld [vmem:[%s276 + $0x30] sm:$0xf]
        %v547 = vld [vmem:[%s276 + $0x34] sm:$0xf]
        %v548 = vld [vmem:[%s276 + $0x38] sm:$0xf]
        %v549 = vld [vmem:[%s276 + $0x3c] sm:$0xf]
        %v566 = vunpack.c.l.b16 %v534
        %v567 = vunpack.c.l.b16 %v535
        %v568 = vunpack.c.l.b16 %v536
        %v569 = vunpack.c.l.b16 %v537
        %v570 = vunpack.c.l.b16 %v538
        %v571 = vunpack.c.l.b16 %v539
        %v572 = vunpack.c.l.b16 %v540
        %v573 = vunpack.c.l.b16 %v541
        %v574 = vunpack.c.l.b16 %v542
        %v575 = vunpack.c.l.b16 %v543
        %v576 = vunpack.c.l.b16 %v544
        %v577 = vunpack.c.l.b16 %v545
        %v578 = vunpack.c.l.b16 %v546
        %v579 = vunpack.c.l.b16 %v547
        %v580 = vunpack.c.l.b16 %v548
        %v581 = vunpack.c.l.b16 %v549
        %v582 = vpack.c.b16 %v567, %v566
        %v583 = vpack.c.b16 %v569, %v568
        %v584 = vpack.c.b16 %v571, %v570
        %v585 = vpack.c.b16 %v573, %v572
        %v586 = vpack.c.b16 %v575, %v574
        %v587 = vpack.c.b16 %v577, %v576
        %v588 = vpack.c.b16 %v579, %v578
        %v589 = vpack.c.b16 %v581, %v580
        %598 = vmatpush.bf16.msra.mxu0 %v589
        %599 = vmatpush.bf16.msra.mxu0 %v588
        %600 = vmatpush.bf16.msra.mxu0 %v587
        %601 = vmatpush.bf16.msra.mxu0 %v586
        %602 = vmatpush.bf16.msra.mxu0 %v585
        %603 = vmatpush.bf16.msra.mxu0 %v584
        %604 = vmatpush.bf16.msra.mxu0 %v583
        %605 = vmatpush.bf16.msra.mxu0 %v582
        %606 = vmatmul.bf16.gmra.mxu0 %v533
        %v607 = vpop.f32.mrf.mxu0
        %v608 = vadd.f32 0.0, %v607
        %v609 = vpop.f32.mrf.mxu0
        %610 = vdwg.mxu0
        %v611 = vmul.f32 %v608, 0.5
        %v612 = vtanh.pop %v611
        %v613 = vmul.f32 %v612, 0.5
        %v614 = vadd.f32 %v613, 0.5
        %615 = vst [vmem:[%s303] sm:$0xff] %v614
        %s616 = sand.u32 %s140, 1
        %s617 = scalar_lea.sflag [#allocation4], %s616
        %s618 = sand.u32 %s140, 1
        %s619 = smul.addr %s618, 8
        %s620 = scalar_lea.vmem [#allocation11], %s619
        // Predicated region
        $region61: #{tpu_custom_call.1} parent=39 // pred_check
          %p621 = pneg %p150
        $region62: #{tpu_custom_call.1} parent=39 // pred_check_branch
          %623 = sbr.rel (%p621) target = $region64
        $region63: #{tpu_custom_call.1} parent=39 // pred_region
          %625 = vsyncadd %s617, 0
          %s626 = smul.addr %s22, 8
          %s627 = scalar_lea.hbm %s5, %s626
          %s629 = sshll.u32 %s620, 4
          %s630 = int_to_ptr.vmem [resolvable:$true] %s629
          %s631 = sshll.u32 %s627, 4
          %s632 = int_to_ptr.hbm [resolvable:$true] %s631
          %634 = dma.vmem_to_hbm [thread:$0]  %s630, 128, %s632, %s617
        $region64: #{tpu_custom_call.1} parent=39 // pred_fallthru
          _
      $region40: #{tpu_custom_call.1} parent=5 // pred_fallthru
        _
      %p635 = scmp.le.s32.totalorder 2, %s17
      // Predicated region
      $region65: #{tpu_custom_call.1} parent=5 // pred_check
        %p636 = pneg %p635
      $region66: #{tpu_custom_call.1} parent=5 // pred_check_branch
        %638 = sbr.rel (%p636) target = $region68
      $region67: #{tpu_custom_call.1} parent=5 // pred_region
        %s639 = ssub.s32 %s17, 2
        // Predicated region
        $region69: #{tpu_custom_call.1} parent=67 // pred_check
          %p640 = pneg %p156
        $region70: #{tpu_custom_call.1} parent=67 // pred_check_branch
          %642 = sbr.rel (%p640) target = $region72
        $region71: #{tpu_custom_call.1} parent=67 // pred_region
          %s643 = sand.u32 %s141, 1
          %s644 = scalar_lea.sflag [#allocation4], %s643
          %s645 = sand.u32 %s141, 1
          %s646 = smul.addr %s645, 8
          %s647 = scalar_lea.vmem [#allocation11], %s646
          %649 = dma.done %s644, 128
        $region72: #{tpu_custom_call.1} parent=67 // pred_fallthru
          _
      $region68: #{tpu_custom_call.1} parent=5 // pred_fallthru
        _
    $region6: #{tpu_custom_call.1} parent=1 // loop_footer
      %s21 = sadd.s32 1, %s17
    $region7: #{tpu_custom_call.1} parent=1 // loop_footer_branch
      %16 = sbr.rel target = $region3
    $region8: #{tpu_custom_call.1} parent=1 // loop_exit
      _
    %650 = vsyncpa [#allocation3], 1
    %s651 = scalar_lea.sflag [#allocation3], 1
    %652 = vsyncpa %s651, 1
    %653 = vsyncpa [#allocation6], 1
    %654 = vsyncpa [#allocation9], 1
    %655 = vsyncpa [#allocation4], 1
    %s656 = scalar_lea.sflag [#allocation4], 1
    %657 = vsyncpa %s656, 1

</llo_original>
